<compile_context>
chip_gen: v6e
topology: v6e:2x2x1
jax: 0.10.0
libtpu: 0.0.40
codegen_flags: <defaults>
</compile_context>

<pallas_src>
import jax
import jax.numpy as jnp
from jax.experimental import pallas as pl
from jax.experimental.pallas import tpu as pltpu

EPS = 1e-6


def _sublayer_connection_kernel(x_ref, w_ref, wb_ref, o_ref):
    """One (TM, H) token tile: layernorm -> Linear on MXU -> +bias -> +residual."""
    x = x_ref[...].astype(jnp.float32)                        # (TM, H) f32
    h = x.shape[-1]

    # LayerNorm stats, torch semantics: unbiased std, eps added to std.
    mean = jnp.sum(x, axis=-1, keepdims=True) * (1.0 / h)     # (TM, 1)
    c = x - mean
    var = jnp.sum(c * c, axis=-1, keepdims=True) * (1.0 / (h - 1))
    inv_std = pl.reciprocal(jnp.sqrt(var) + EPS, approx=True)  # EUP slot

    # a_2 / b_2 are folded into W / bias in the wrapper, so the normed tile is
    # just the centered, scaled activations.
    normed = c * inv_std                                      # (TM, H) f32

    # Sublayer: Linear(H, H) on the MXU, bf16 feed / f32 accumulate.
    proj = jnp.dot(normed.astype(jnp.bfloat16), w_ref[...],
                   preferred_element_type=jnp.float32)        # (TM, H) f32

    # Dropout (eval / p=0.0) is identity; bias + residual fused in one pass.
    # TODO(synk): training-mode dropout would use pltpu.prng_seed/prng_random_bits.
    o_ref[...] = (x + proj + wb_ref[...]).astype(o_ref.dtype)


def _round_up(n, m):
    return ((n + m - 1) // m) * m


def _vmem_limit_bytes():
    """Generation-aware scoped-VMEM limit (headroom under physical capacity)."""
    try:
        cap = int(pltpu.get_tpu_info().vmem_capacity_bytes)   # 64 MiB v7x, 128 MiB v5e/v6e
        return min(cap * 7 // 8, 112 << 20)
    except Exception:
        return 48 << 20                                       # safe on every generation


def _pick_tm(M, H, x_bytes, out_bytes, vmem_limit, tm_max=1024):
    """Largest token tile that fits VMEM; keep >= 2 grid steps for megacore."""
    fixed = H * H * 2                                         # bf16 W', single-buffered
    # Per token row: x in + out (double-buffered each) plus ~3 f32 in-kernel
    # temporaries (f32 x copy, centered/normed tile, matmul result).
    per_row = H * (2 * x_bytes + 2 * out_bytes + 3 * 4)
    avail = max(int(vmem_limit * 0.9) - fixed, per_row * 8)
    tm = max(8, (avail // per_row) // 8 * 8)
    tm = min(tm, tm_max)
    if tm >= 128:
        tm = tm // 128 * 128                                  # clean MXU passes
    tm = min(tm, _round_up(M, 8))                             # never exceed token count
    if M > 8:
        # >= 2 grid steps so the "parallel" axis shards across both v7x TCs.
        tm = min(tm, _round_up(pl.cdiv(M, 2), 8))
    return tm


def sublayer_connection(x, a_2, b_2, w, w_bias):
    """out = x + Linear(LayerNorm(x));  x: (B, S, H)."""
    B, S, H = x.shape
    M = B * S

    # Fold LayerNorm affine params through the linear layer (in f32, before the
    # bf16 cast):  W' = diag(a_2) @ W ,  b' = w_bias + b_2 @ W.
    # TODO(synk): in a real layer, pre-fold / pre-cast these once at load time
    # instead of per call.
    w32 = w.astype(jnp.float32)
    w_folded = (a_2.astype(jnp.float32)[:, None] * w32).astype(jnp.bfloat16)
    wb_folded = (w_bias.astype(jnp.float32)
                 + b_2.astype(jnp.float32) @ w32).reshape(1, H)

    vmem_limit = _vmem_limit_bytes()
    tm = _pick_tm(M, H, x.dtype.itemsize, x.dtype.itemsize, vmem_limit)

    x2 = x.reshape(M, H)   # no padding: ragged last tile is masked by Pallas

    def _call(resident_kwargs):
        return pl.pallas_call(
            _sublayer_connection_kernel,
            out_shape=jax.ShapeDtypeStruct((M, H), x.dtype),
            grid_spec=pltpu.PrefetchScalarGridSpec(
                num_scalar_prefetch=0,
                grid=(pl.cdiv(M, tm),),
                in_specs=[
                    # Token tiles: double-buffered pipeline.
                    pl.BlockSpec((tm, H), lambda i: (i, 0)),
                    # Resident operands (constant block index).
                    pl.BlockSpec((H, H), lambda i: (0, 0), **resident_kwargs),
                    pl.BlockSpec((1, H), lambda i: (0, 0), **resident_kwargs),
                ],
                out_specs=pl.BlockSpec((tm, H), lambda i: (i, 0)),
            ),
            compiler_params=pltpu.CompilerParams(
                dimension_semantics=("parallel",),
                vmem_limit_bytes=vmem_limit,
            ),
        )(x2, w_folded, wb_folded)

    try:
        # Single-buffer the resident operands: halves the (H,H) weight VMEM cost.
        out = _call({"pipeline_mode": pl.Buffered(1)})
    except Exception:
        # Fallback for Pallas versions that reject buffer_count=1.
        out = _call({})

    return out.reshape(B, S, H)


def _reference(x, a_2, b_2, w, w_bias):
    """Pure-JAX f32 reference with torch LayerNorm semantics."""
    x32 = x.astype(jnp.float32)
    mean = jnp.mean(x32, axis=-1, keepdims=True)
    c = x32 - mean
    var = jnp.sum(c * c, axis=-1, keepdims=True) / (x.shape[-1] - 1)
    std = jnp.sqrt(var)
    normed = a_2 * c / (std + EPS) + b_2
    proj = normed @ w + w_bias
    return (x32 + proj).astype(x.dtype)


if __name__ == "__main__":
    key = jax.random.PRNGKey(0)
    B, S, H = 2, 8, 128        # H multiple of 128 -> lane-dense stores, full MXU tiles
    kx, kw, kb, ka, kb2 = jax.random.split(key, 5)

    x = jax.random.normal(kx, (B, S, H), dtype=jnp.float32)

    # LayerNorm affine params (non-trivial to exercise the W/bias folding).
    a_2 = 1.0 + 0.1 * jax.random.normal(ka, (H,), dtype=jnp.float32)
    b_2 = 0.1 * jax.random.normal(kb2, (H,), dtype=jnp.float32)

    # Deterministic synthetic sublayer (Linear H -> H).
    w = jax.random.normal(kw, (H, H), dtype=jnp.float32) * 0.05
    w_bias = jax.random.normal(kb, (H,), dtype=jnp.float32) * 0.01

    out = jax.block_until_ready(sublayer_connection(x, a_2, b_2, w, w_bias))

    ref = _reference(x, a_2, b_2, w, w_bias)
    assert out.shape == (B, S, H)
    # Tolerance accounts for bf16 MXU feed + approx reciprocal + param folding.
    assert jnp.allclose(out, ref, atol=2e-2, rtol=2e-2), "mismatch vs reference"

    print("KERNEL_OK")
</pallas_src>

<mosaic_0001>
module attributes {stable_mosaic.version = 11 : i64} {
  func.func @_sublayer_connection_kernel(%arg0: i32, %arg1: memref<8x128xf32, #tpu.memory_space<vmem>>, %arg2: memref<128x128xbf16, #tpu.memory_space<vmem>>, %arg3: memref<1x128xf32, #tpu.memory_space<vmem>>, %arg4: memref<8x128xf32, #tpu.memory_space<vmem>>) attributes {dimension_semantics = [#tpu.dimension_semantics<parallel>], iteration_bounds = array<i64: 2>, scalar_prefetch = 0 : i64, scratch_operands = 0 : i64, tpu.core_type = #tpu.core_type<tc>, window_params = [{transform_indices = @transform_0, window_bounds = array<i64: 8, 128>}, {pipeline_mode = #tpu.pipeline_mode<synchronous>, transform_indices = @transform_1, window_bounds = array<i64: 128, 128>}, {pipeline_mode = #tpu.pipeline_mode<synchronous>, transform_indices = @transform_2, window_bounds = array<i64: 1, 128>}, {transform_indices = @transform_3, window_bounds = array<i64: 8, 128>}]} {
    %c0 = arith.constant 0 : index
    %c0_0 = arith.constant 0 : index
    %0 = vector.load %arg1[%c0, %c0_0] : memref<8x128xf32, #tpu.memory_space<vmem>>, vector<8x128xf32>
    %cst = arith.constant dense<0.000000e+00> : vector<8xf32>
    %1 = vector.multi_reduction <add>, %0, %cst [1] : vector<8x128xf32> to vector<8xf32>
    %2 = vector.shape_cast %1 : vector<8xf32> to vector<8x1xf32>
    %cst_1 = arith.constant 7.812500e-03 : f32
    %3 = vector.broadcast %cst_1 : f32 to vector<8x1xf32>
    %4 = arith.mulf %2, %3 : vector<8x1xf32>
    %5 = vector.broadcast %4 : vector<8x1xf32> to vector<8x128xf32>
    %6 = arith.subf %0, %5 : vector<8x128xf32>
    %7 = arith.mulf %6, %6 : vector<8x128xf32>
    %cst_2 = arith.constant dense<0.000000e+00> : vector<8xf32>
    %8 = vector.multi_reduction <add>, %7, %cst_2 [1] : vector<8x128xf32> to vector<8xf32>
    %9 = vector.shape_cast %8 : vector<8xf32> to vector<8x1xf32>
    %cst_3 = arith.constant 0.00787401571 : f32
    %10 = vector.broadcast %cst_3 : f32 to vector<8x1xf32>
    %11 = arith.mulf %9, %10 : vector<8x1xf32>
    %12 = math.sqrt %11 : vector<8x1xf32>
    %cst_4 = arith.constant 9.99999997E-7 : f32
    %13 = vector.broadcast %cst_4 : f32 to vector<8x1xf32>
    %14 = arith.addf %12, %13 : vector<8x1xf32>
    %15 = tpu.reciprocal %14 {approx = true} : vector<8x1xf32> -> vector<8x1xf32>
    %16 = vector.broadcast %15 : vector<8x1xf32> to vector<8x128xf32>
    %17 = arith.mulf %6, %16 : vector<8x128xf32>
    %18 = arith.truncf %17 : vector<8x128xf32> to vector<8x128xbf16>
    %c0_5 = arith.constant 0 : index
    %c0_6 = arith.constant 0 : index
    %19 = vector.load %arg2[%c0_5, %c0_6] : memref<128x128xbf16, #tpu.memory_space<vmem>>, vector<128x128xbf16>
    %cst_7 = arith.constant dense<0.000000e+00> : vector<8x128xf32>
    %20 = tpu.matmul %18, %19, %cst_7 {dimension_numbers = #tpu.dot_dimension_numbers<[1], [0], [0], [1], [0, 0, 1, 1], [], []>} : vector<8x128xbf16>, vector<128x128xbf16>, vector<8x128xf32> -> vector<8x128xf32>
    %21 = arith.addf %0, %20 : vector<8x128xf32>
    %c0_8 = arith.constant 0 : index
    %c0_9 = arith.constant 0 : index
    %22 = vector.load %arg3[%c0_8, %c0_9] : memref<1x128xf32, #tpu.memory_space<vmem>>, vector<1x128xf32>
    %23 = vector.broadcast %22 : vector<1x128xf32> to vector<8x128xf32>
    %24 = arith.addf %21, %23 : vector<8x128xf32>
    %c0_10 = arith.constant 0 : index
    %c0_11 = arith.constant 0 : index
    %25 = vector.load %arg4[%c0_10, %c0_11] : memref<8x128xf32, #tpu.memory_space<vmem>>, vector<8x128xf32>
    tpu.vector_store %arg4[%c0_10, %c0_11], %24 {strides = array<i32>} : memref<8x128xf32, #tpu.memory_space<vmem>>, vector<8x128xf32>,
    return
  }
  func.func @transform_0(%arg0: i32) -> (i32, i32) {
    %c0_i32 = arith.constant 0 : i32
    %c0_i32_0 = arith.constant 0 : i32
    return %arg0, %c0_i32 : i32, i32
  }
  func.func @transform_1(%arg0: i32) -> (i32, i32) {
    %c0_i32 = arith.constant 0 : i32
    %c0_i32_0 = arith.constant 0 : i32
    %c0_i32_1 = arith.constant 0 : i32
    return %c0_i32, %c0_i32_0 : i32, i32
  }
  func.func @transform_2(%arg0: i32) -> (i32, i32) {
    %c0_i32 = arith.constant 0 : i32
    %c0_i32_0 = arith.constant 0 : i32
    %c0_i32_1 = arith.constant 0 : i32
    return %c0_i32, %c0_i32_0 : i32, i32
  }
  func.func @transform_3(%arg0: i32) -> (i32, i32) {
    %c0_i32 = arith.constant 0 : i32
    %c0_i32_0 = arith.constant 0 : i32
    return %arg0, %c0_i32 : i32, i32
  }
}

module attributes {stable_mosaic.version = 11 : i64} {
  func.func @_sublayer_connection_kernel(%arg0: i32, %arg1: memref<8x128xf32, #tpu.memory_space<vmem>>, %arg2: memref<128x128xbf16, #tpu.memory_space<vmem>>, %arg3: memref<1x128xf32, #tpu.memory_space<vmem>>, %arg4: memref<8x128xf32, #tpu.memory_space<vmem>>) attributes {dimension_semantics = [#tpu.dimension_semantics<parallel>], iteration_bounds = array<i64: 2>, scalar_prefetch = 0 : i64, scratch_operands = 0 : i64, tpu.core_type = #tpu.core_type<tc>, window_params = [{transform_indices = @transform_0, window_bounds = array<i64: 8, 128>}, {pipeline_mode = #tpu.pipeline_mode<synchronous>, transform_indices = @transform_1, window_bounds = array<i64: 128, 128>}, {pipeline_mode = #tpu.pipeline_mode<synchronous>, transform_indices = @transform_2, window_bounds = array<i64: 1, 128>}, {transform_indices = @transform_3, window_bounds = array<i64: 8, 128>}]} {
    %c0 = arith.constant 0 : index
    %c0_0 = arith.constant 0 : index
    %0 = vector.load %arg1[%c0, %c0_0] : memref<8x128xf32, #tpu.memory_space<vmem>>, vector<8x128xf32>
    %cst = arith.constant dense<0.000000e+00> : vector<8xf32>
    %1 = vector.multi_reduction <add>, %0, %cst [1] : vector<8x128xf32> to vector<8xf32>
    %2 = vector.shape_cast %1 : vector<8xf32> to vector<8x1xf32>
    %cst_1 = arith.constant 7.812500e-03 : f32
    %3 = vector.broadcast %cst_1 : f32 to vector<8x1xf32>
    %4 = arith.mulf %2, %3 : vector<8x1xf32>
    %5 = vector.broadcast %4 : vector<8x1xf32> to vector<8x128xf32>
    %6 = arith.subf %0, %5 : vector<8x128xf32>
    %7 = arith.mulf %6, %6 : vector<8x128xf32>
    %cst_2 = arith.constant dense<0.000000e+00> : vector<8xf32>
    %8 = vector.multi_reduction <add>, %7, %cst_2 [1] : vector<8x128xf32> to vector<8xf32>
    %9 = vector.shape_cast %8 : vector<8xf32> to vector<8x1xf32>
    %cst_3 = arith.constant 0.00787401571 : f32
    %10 = vector.broadcast %cst_3 : f32 to vector<8x1xf32>
    %11 = arith.mulf %9, %10 : vector<8x1xf32>
    %12 = math.sqrt %11 : vector<8x1xf32>
    %cst_4 = arith.constant 9.99999997E-7 : f32
    %13 = vector.broadcast %cst_4 : f32 to vector<8x1xf32>
    %14 = arith.addf %12, %13 : vector<8x1xf32>
    %15 = tpu.reciprocal %14 {approx = true} : vector<8x1xf32> -> vector<8x1xf32>
    %16 = vector.broadcast %15 : vector<8x1xf32> to vector<8x128xf32>
    %17 = arith.mulf %6, %16 : vector<8x128xf32>
    %18 = arith.truncf %17 : vector<8x128xf32> to vector<8x128xbf16>
    %c0_5 = arith.constant 0 : index
    %c0_6 = arith.constant 0 : index
    %19 = vector.load %arg2[%c0_5, %c0_6] : memref<128x128xbf16, #tpu.memory_space<vmem>>, vector<128x128xbf16>
    %cst_7 = arith.constant dense<0.000000e+00> : vector<8x128xf32>
    %20 = tpu.matmul %18, %19, %cst_7 {dimension_numbers = #tpu.dot_dimension_numbers<[1], [0], [0], [1], [0, 0, 1, 1], [], []>} : vector<8x128xbf16>, vector<128x128xbf16>, vector<8x128xf32> -> vector<8x128xf32>
    %21 = arith.addf %0, %20 : vector<8x128xf32>
    %c0_8 = arith.constant 0 : index
    %c0_9 = arith.constant 0 : index
    %22 = vector.load %arg3[%c0_8, %c0_9] : memref<1x128xf32, #tpu.memory_space<vmem>>, vector<1x128xf32>
    %23 = vector.broadcast %22 : vector<1x128xf32> to vector<8x128xf32>
    %24 = arith.addf %21, %23 : vector<8x128xf32>
    %c0_10 = arith.constant 0 : index
    %c0_11 = arith.constant 0 : index
    %25 = vector.load %arg4[%c0_10, %c0_11] : memref<8x128xf32, #tpu.memory_space<vmem>>, vector<8x128xf32>
    tpu.vector_store %arg4[%c0_10, %c0_11], %24 {strides = array<i32>} : memref<8x128xf32, #tpu.memory_space<vmem>>, vector<8x128xf32>,
    return
  }
  func.func @transform_0(%arg0: i32) -> (i32, i32) {
    %c0_i32 = arith.constant 0 : i32
    %c0_i32_0 = arith.constant 0 : i32
    return %arg0, %c0_i32 : i32, i32
  }
  func.func @transform_1(%arg0: i32) -> (i32, i32) {
    %c0_i32 = arith.constant 0 : i32
    %c0_i32_0 = arith.constant 0 : i32
    %c0_i32_1 = arith.constant 0 : i32
    return %c0_i32, %c0_i32_0 : i32, i32
  }
  func.func @transform_2(%arg0: i32) -> (i32, i32) {
    %c0_i32 = arith.constant 0 : i32
    %c0_i32_0 = arith.constant 0 : i32
    %c0_i32_1 = arith.constant 0 : i32
    return %c0_i32, %c0_i32_0 : i32, i32
  }
  func.func @transform_3(%arg0: i32) -> (i32, i32) {
    %c0_i32 = arith.constant 0 : i32
    %c0_i32_0 = arith.constant 0 : i32
    return %arg0, %c0_i32 : i32, i32
  }
}

</mosaic_0001>

<llo_original>
// kernel: tpu_custom_call.1
$region0: #{tpu_custom_call.1}
  #allocation0 [shape = 'u32[]', space=smem, size = 0x4, offset = 0x4, fixed_abs, tag = 'smem constant byte address 0x4 - core index']
  #allocation1 [shape = 'u32[144,128]{1,0:T(1,128)}', space=vmem, size = 0x12000, scoped, tag = 'internal scratch']
  %s0 = inlined_call_operand.hbm [shape: f32[16,128], index: 0, kind: input, shape index: {}]
  %s1 = inlined_call_operand.hbm [shape: bf16[128,128], index: 1, kind: input, shape index: {}]
  %s2 = inlined_call_operand.vmem [shape: f32[1,128], index: 2, kind: input, shape index: {}]
  %s3 = inlined_call_operand.hbm [shape: f32[16,128], index: 3, kind: output, shape index: {}]
  %s4 = sld [smem:[#allocation0]]
  $region53: #{tpu_custom_call.1} parent=0
    _
  %s6 = ssub.s32 1, %s4
  %s7 = scalar_select 0, %s6, %s4
  $region1: #{tpu_custom_call.1} parent=0
    #allocation2 [shape = 'u8[8192]{0}', space=vmem, size = 0x2000, scoped, tag = 'input window, operand 0']
    #allocation3 [shape = 's32[2]{0}', space=sflag, size = 0x8, scoped, tag = 'scoped memory for tpu_custom_call.1']
    #allocation4 [shape = 's32[2]{0}', space=sflag, size = 0x8, scoped, tag = 'scoped memory for tpu_custom_call.1']
    #allocation5 [shape = 'u8[32768]{0}', space=vmem, size = 0x8000, scoped, tag = 'input window, operand 1, single buffered']
    #allocation6 [shape = 's32[1]{0}', space=sflag, size = 0x4, scoped, tag = 'scoped memory for tpu_custom_call.1']
    #allocation7 [shape = 'u8[8192]{0}', space=vmem, size = 0x2000, scoped, tag = 'output window, operand 0']
    %8 = vsyncpa [#allocation3], 0
    %s9 = scalar_lea.sflag [#allocation3], 1
    %10 = vsyncpa %s9, 0
    %11 = vsyncpa [#allocation6], 0
    %12 = vsyncpa [#allocation4], 0
    %s13 = scalar_lea.sflag [#allocation4], 1
    %14 = vsyncpa %s13, 0
    loop: start=0, step=1, limit=4
    $region2: #{tpu_custom_call.1} parent=1 // loop_pre_header
      _
    $region3: #{tpu_custom_call.1} parent=1 // loop_header
      %s16 = sphi 0, %s20
      %p17 = scmp.ge.s32.totalorder %s16, 4
      %s26 = sphi 0, %s28
      %s29 = sphi 0, %s26
      %s30 = sphi 0, %s29
      %s46 = sphi 0, %s30
      %s50 = sphi 0, %s50
      %s52 = sphi 0, %s50
      %s53 = sphi 0, %s52
      %s67 = sphi 0, %s53
      %s71 = sphi 0, %s71
      %s73 = sphi 0, %s71
      %s74 = sphi 0, %s73
      %s88 = sphi 0, %s74
      %s94 = sphi 0, %s96
      %s97 = sphi 0, %s94
      %s98 = sphi 0, %s97
      %s114 = sphi 0, %s98
    $region4: #{tpu_custom_call.1} parent=1 // loop_header_branch
      %19 = sbr.rel (%p17) target = $region8
    $region5: #{tpu_custom_call.1} parent=1 // loop_body
      %s21 = ssub.s32 %s16, 1
      %s22 = ssub.s32 %s16, 2
      %s23 = sadd.s32 %s16, 1
      %s24 = ssub.s32 %s16, %s23
      %p25 = scmp.eq.s32.totalorder %s24, 0
      %s27 = sadd.s32 %s26, 1
      %s28 = scalar_select %p25, %s26, %s27
      %p31 = pneg %p25
      %p32 = scmp.eq.s32.totalorder %s16, 1
      %p33 = por %p31, %p32
      %p34 = scmp.ne.s32.totalorder %s26, %s29
      %p35 = scmp.eq.s32.totalorder %s16, 0
      %p36 = por %p34, %p35
      %p37 = scmp.ne.s32.totalorder %s26, %s29
      %p38 = scmp.eq.s32.totalorder %s21, 1
      %p39 = por %p37, %p38
      %p40 = scmp.ne.s32.totalorder %s29, %s30
      %p41 = scmp.eq.s32.totalorder %s21, 0
      %p42 = por %p40, %p41
      %p43 = scmp.ne.s32.totalorder %s29, %s30
      %p44 = scmp.eq.s32.totalorder %s22, 1
      %p45 = por %p43, %p44
      %p47 = scmp.ne.s32.totalorder %s30, %s46
      %p48 = scmp.eq.s32.totalorder %s22, 0
      %p49 = por %p47, %p48
      %s51 = sadd.s32 %s50, 1
      %p54 = scmp.eq.s32.totalorder %s16, 1
      %p55 = scmp.ne.s32.totalorder %s50, %s52
      %p56 = scmp.eq.s32.totalorder %s16, 0
      %p57 = por %p55, %p56
      %p58 = scmp.ne.s32.totalorder %s50, %s52
      %p59 = scmp.eq.s32.totalorder %s21, 1
      %p60 = por %p58, %p59
      %p61 = scmp.ne.s32.totalorder %s52, %s53
      %p62 = scmp.eq.s32.totalorder %s21, 0
      %p63 = por %p61, %p62
      %p64 = scmp.ne.s32.totalorder %s52, %s53
      %p65 = scmp.eq.s32.totalorder %s22, 1
      %p66 = por %p64, %p65
      %p68 = scmp.ne.s32.totalorder %s53, %s67
      %p69 = scmp.eq.s32.totalorder %s22, 0
      %p70 = por %p68, %p69
      %s72 = sadd.s32 %s71, 1
      %p75 = scmp.eq.s32.totalorder %s16, 1
      %p76 = scmp.ne.s32.totalorder %s71, %s73
      %p77 = scmp.eq.s32.totalorder %s16, 0
      %p78 = por %p76, %p77
      %p79 = scmp.ne.s32.totalorder %s71, %s73
      %p80 = scmp.eq.s32.totalorder %s21, 1
      %p81 = por %p79, %p80
      %p82 = scmp.ne.s32.totalorder %s73, %s74
      %p83 = scmp.eq.s32.totalorder %s21, 0
      %p84 = por %p82, %p83
      %p85 = scmp.ne.s32.totalorder %s73, %s74
      %p86 = scmp.eq.s32.totalorder %s22, 1
      %p87 = por %p85, %p86
      %p89 = scmp.ne.s32.totalorder %s74, %s88
      %p90 = scmp.eq.s32.totalorder %s22, 0
      %p91 = por %p89, %p90
      %s92 = ssub.s32 %s16, %s23
      %p93 = scmp.eq.s32.totalorder %s92, 0
      %s95 = sadd.s32 %s94, 1
      %s96 = scalar_select %p93, %s94, %s95
      %p99 = pneg %p93
      %p100 = scmp.eq.s32.totalorder %s16, 1
      %p101 = por %p99, %p100
      %p102 = scmp.ne.s32.totalorder %s94, %s97
      %p103 = scmp.eq.s32.totalorder %s16, 0
      %p104 = por %p102, %p103
      %p105 = scmp.ne.s32.totalorder %s94, %s97
      %p106 = scmp.eq.s32.totalorder %s21, 1
      %p107 = por %p105, %p106
      %p108 = scmp.ne.s32.totalorder %s97, %s98
      %p109 = scmp.eq.s32.totalorder %s21, 0
      %p110 = por %p108, %p109
      %p111 = scmp.ne.s32.totalorder %s97, %s98
      %p112 = scmp.eq.s32.totalorder %s22, 1
      %p113 = por %p111, %p112
      %p115 = scmp.ne.s32.totalorder %s98, %s114
      %p116 = scmp.eq.s32.totalorder %s22, 0
      %p117 = por %p115, %p116
      %p118 = scmp.le.s32.totalorder 1, %s16
      %p119 = scmp.lt.s32.totalorder %s16, 3
      %p120 = pnand %p118, %p119
      %p121 = pneg %p120
      // Predicated region
      $region9: #{tpu_custom_call.1} parent=5 // pred_check
        _
      $region10: #{tpu_custom_call.1} parent=5 // pred_check_branch
        %123 = sbr.rel (%p120) target = $region12
      $region11: #{tpu_custom_call.1} parent=5 // pred_region
        %s124 = ssub.s32 %s16, 1
        // Predicated region
        $region13: #{tpu_custom_call.1} parent=11 // pred_check
          %p125 = pneg %p63
        $region14: #{tpu_custom_call.1} parent=11 // pred_check_branch
          %127 = sbr.rel (%p125) target = $region16
        $region15: #{tpu_custom_call.1} parent=11 // pred_region
          %s129 = ssub.s32 1024, 1024
          %130 = vsyncadd [#allocation6], %s129
          %s131 = sshll.u32 [#allocation5], 4
          %s132 = int_to_ptr.vmem [resolvable:$true] %s131
          %137 = dma.hbm_to_vmem [thread:$0]  %s1, 1024, %s132, [#allocation6], 64, 64, 4
        $region16: #{tpu_custom_call.1} parent=11 // pred_fallthru
          _
        // Predicated region
        $region17: #{tpu_custom_call.1} parent=11 // pred_check
          %p138 = pneg %p84
        $region18: #{tpu_custom_call.1} parent=11 // pred_check_branch
          %140 = sbr.rel (%p138) target = $region20
        $region19: #{tpu_custom_call.1} parent=11 // pred_region
          _
        $region20: #{tpu_custom_call.1} parent=11 // pred_fallthru
          _
      $region12: #{tpu_custom_call.1} parent=5 // pred_fallthru
        _
      %p141 = scmp.lt.s32.totalorder %s16, 2
      // Predicated region
      $region21: #{tpu_custom_call.1} parent=5 // pred_check
        %p142 = pneg %p141
      $region22: #{tpu_custom_call.1} parent=5 // pred_check_branch
        %144 = sbr.rel (%p142) target = $region24
      $region23: #{tpu_custom_call.1} parent=5 // pred_region
        // Predicated region
        $region25: #{tpu_custom_call.1} parent=23 // pred_check
          %p145 = pneg %p36
        $region26: #{tpu_custom_call.1} parent=23 // pred_check_branch
          %147 = sbr.rel (%p145) target = $region28
        $region27: #{tpu_custom_call.1} parent=23 // pred_region
          %s148 = sand.u32 %s26, 1
          %s149 = scalar_lea.sflag [#allocation3], %s148
          %s150 = sand.u32 %s26, 1
          %s151 = smul.addr %s150, 8
          %s152 = scalar_lea.vmem [#allocation2], %s151
          %s154 = ssub.s32 128, 128
          %155 = vsyncadd %s149, %s154
          %s156 = smul.addr %s16, 128
          %s157 = scalar_lea.hbm %s0, %s156
          %s159 = sshll.u32 %s152, 4
          %s160 = int_to_ptr.vmem [resolvable:$true] %s159
          %162 = dma.hbm_to_vmem [thread:$0]  %s157, 128, %s160, %s149
        $region28: #{tpu_custom_call.1} parent=23 // pred_fallthru
          _
      $region24: #{tpu_custom_call.1} parent=5 // pred_fallthru
        _
      %p163 = scmp.le.s32.totalorder 1, %s16
      %p164 = scmp.lt.s32.totalorder %s16, 3
      %p165 = pnand %p163, %p164
      %p166 = pneg %p165
      // Predicated region
      $region29: #{tpu_custom_call.1} parent=5 // pred_check
        _
      $region30: #{tpu_custom_call.1} parent=5 // pred_check_branch
        %168 = sbr.rel (%p165) target = $region32
      $region31: #{tpu_custom_call.1} parent=5 // pred_region
        %s169 = ssub.s32 %s16, 1
        %s170 = sand.u32 %s29, 1
        %s171 = scalar_lea.sflag [#allocation3], %s170
        %s172 = sand.u32 %s29, 1
        %s173 = smul.addr %s172, 8
        %s174 = scalar_lea.vmem [#allocation2], %s173
        // Predicated region
        $region33: #{tpu_custom_call.1} parent=31 // pred_check
          %p175 = pneg %p42
        $region34: #{tpu_custom_call.1} parent=31 // pred_check_branch
          %177 = sbr.rel (%p175) target = $region36
        $region35: #{tpu_custom_call.1} parent=31 // pred_region
          %178 = dma.done %s171, 128
        $region36: #{tpu_custom_call.1} parent=31 // pred_fallthru
          _
        // Predicated region
        $region37: #{tpu_custom_call.1} parent=31 // pred_check
          %p179 = pneg %p63
        $region38: #{tpu_custom_call.1} parent=31 // pred_check_branch
          %181 = sbr.rel (%p179) target = $region40
        $region39: #{tpu_custom_call.1} parent=31 // pred_region
          %182 = dma.done [#allocation6], 1024
        $region40: #{tpu_custom_call.1} parent=31 // pred_fallthru
          _
        %s183 = sand.u32 %s29, 1
        %s184 = scalar_lea.sflag [#allocation3], %s183
        %s185 = sand.u32 %s29, 1
        %s186 = smul.addr %s185, 8
        %s187 = scalar_lea.vmem [#allocation2], %s186
        %p188 = pneg %p42
        %p189 = pneg %p39
        %p190 = pneg %p63
        %p191 = pneg %p60
        %p192 = pneg %p84
        %p193 = pneg %p81
        %p194 = pneg %p110
        %p195 = pneg %p107
        %s196 = sand.u32 %s97, 1
        %s197 = scalar_lea.sflag [#allocation4], %s196
        %s198 = sand.u32 %s97, 1
        %s199 = smul.addr %s198, 8
        %s200 = scalar_lea.vmem [#allocation7], %s199
        %v202 = vld [vmem:[%s174] sm:$0xff]
        %203 = vadd.xlane.f32.xlu0 %v202
        %v204 = vpop.xlane.xlu0 %203
        %v205 = vmul.f32 %v204, 0.0078125
        %v206 = vsub.f32 %v202, %v205
        %v207 = vmul.f32 %v206, %v206
        %208 = vadd.xlane.f32.xlu0 %v207
        %v209 = vpop.xlane.xlu0 %208
        %v210 = vmul.f32 %v209, 0.007874016
        %v211 = vrsqrt.pop %v210
        %v212 = vmul.f32 %v210, %v211
        %vm213 = vcmp.eq.f32.partialorder %v210, inf
        %v214 = vsel %vm213, %v210, %v212
        %vm215 = vcmp.eq.f32.partialorder %v210, 0.0
        %v216 = vand.u32 %v210, 2147483648
        %v217 = vsel %vm215, %v216, %v214
        %v218 = vadd.f32 %v217, 1e-06
        %v219 = vrcp.pop %v218
        %v220 = vmul.f32 %v206, %v219
        %v221 = vpack.c.bf16 %v220, %v220
        %v222 = vld [vmem:[#allocation5] sm:$0xf]
        %v223 = vld [vmem:[#allocation5 + $0x4] sm:$0xf]
        %v224 = vld [vmem:[#allocation5 + $0x8] sm:$0xf]
        %v225 = vld [vmem:[#allocation5 + $0xc] sm:$0xf]
        %v226 = vld [vmem:[#allocation5 + $0x10] sm:$0xf]
        %v227 = vld [vmem:[#allocation5 + $0x14] sm:$0xf]
        %v228 = vld [vmem:[#allocation5 + $0x18] sm:$0xf]
        %v229 = vld [vmem:[#allocation5 + $0x1c] sm:$0xf]
        %v230 = vld [vmem:[#allocation5 + $0x20] sm:$0xf]
        %v231 = vld [vmem:[#allocation5 + $0x24] sm:$0xf]
        %v232 = vld [vmem:[#allocation5 + $0x28] sm:$0xf]
        %v233 = vld [vmem:[#allocation5 + $0x2c] sm:$0xf]
        %v234 = vld [vmem:[#allocation5 + $0x30] sm:$0xf]
        %v235 = vld [vmem:[#allocation5 + $0x34] sm:$0xf]
        %v236 = vld [vmem:[#allocation5 + $0x38] sm:$0xf]
        %v237 = vld [vmem:[#allocation5 + $0x3c] sm:$0xf]
        %v254 = vunpack.c.l.b16 %v222
        %v255 = vunpack.c.l.b16 %v223
        %v256 = vunpack.c.l.b16 %v224
        %v257 = vunpack.c.l.b16 %v225
        %v258 = vunpack.c.l.b16 %v226
        %v259 = vunpack.c.l.b16 %v227
        %v260 = vunpack.c.l.b16 %v228
        %v261 = vunpack.c.l.b16 %v229
        %v262 = vunpack.c.l.b16 %v230
        %v263 = vunpack.c.l.b16 %v231
        %v264 = vunpack.c.l.b16 %v232
        %v265 = vunpack.c.l.b16 %v233
        %v266 = vunpack.c.l.b16 %v234
        %v267 = vunpack.c.l.b16 %v235
        %v268 = vunpack.c.l.b16 %v236
        %v269 = vunpack.c.l.b16 %v237
        %v270 = vpack.c.b16 %v255, %v254
        %v271 = vpack.c.b16 %v257, %v256
        %v272 = vpack.c.b16 %v259, %v258
        %v273 = vpack.c.b16 %v261, %v260
        %v274 = vpack.c.b16 %v263, %v262
        %v275 = vpack.c.b16 %v265, %v264
        %v276 = vpack.c.b16 %v267, %v266
        %v277 = vpack.c.b16 %v269, %v268
        %286 = vmatprep.subr.bf16.mxu0 0
        %287 = vmatpush1.bf16.msra.mxu0 %v277
        %288 = vmatprep.subr.bf16.mxu0 0
        %289 = vmatpush1.bf16.msra.mxu0 %v276
        %290 = vmatprep.subr.bf16.mxu0 0
        %291 = vmatpush1.bf16.msra.mxu0 %v275
        %292 = vmatprep.subr.bf16.mxu0 0
        %293 = vmatpush1.bf16.msra.mxu0 %v274
        %294 = vmatprep.subr.bf16.mxu0 0
        %295 = vmatpush1.bf16.msra.mxu0 %v273
        %296 = vmatprep.subr.bf16.mxu0 0
        %297 = vmatpush1.bf16.msra.mxu0 %v272
        %298 = vmatprep.subr.bf16.mxu0 0
        %299 = vmatpush1.bf16.msra.mxu0 %v271
        %300 = vmatprep.subr.bf16.mxu0 0
        %301 = vmatpush1.bf16.msra.mxu0 %v270
        %302 = vmatprep.subr.bf16.mxu0 0
        %303 = vmatpush2.bf16.msra.mxu0 0
        %304 = vmatprep.subr.bf16.mxu0 0
        %305 = vmatpush2.bf16.msra.mxu0 0
        %306 = vmatprep.subr.bf16.mxu0 0
        %307 = vmatpush2.bf16.msra.mxu0 0
        %308 = vmatprep.subr.bf16.mxu0 0
        %309 = vmatpush2.bf16.msra.mxu0 0
        %310 = vmatprep.subr.bf16.mxu0 0
        %311 = vmatpush2.bf16.msra.mxu0 0
        %312 = vmatprep.subr.bf16.mxu0 0
        %313 = vmatpush2.bf16.msra.mxu0 0
        %314 = vmatprep.subr.bf16.mxu0 0
        %315 = vmatpush2.bf16.msra.mxu0 0
        %316 = vmatprep.subr.bf16.mxu0 0
        %317 = vmatpush2.bf16.msra.mxu0 0
        %318 = vmatprep.mubr.bf16.mxu0 0
        %319 = vmatmul.mubr.bf16.gmra.mxu0 %v221
        %v320 = vpop.f32.mrf.mxu0
        %v321 = vadd.f32 0.0, %v320
        %v322 = vpop.f32.mrf.mxu0
        %v323 = vpop.f32.mrf.mxu0
        %v324 = vpop.f32.mrf.mxu0
        %325 = vdwg.mxu0
        %v326 = vadd.f32 %v202, %v321
        %v327 = vld [vmem:[%s2] sm:$0x1]
        %v329 = vlaneseq
        %v330 = vshrl.u32 %v329, 7
        %v331 = vsub.s32 0, %v330
        %v332 = vrot.slane %v327, %v331
        %v334 = vadd.f32 %v326, %v332
        %335 = vst [vmem:[%s200] sm:$0xff] %v334
        %s336 = sand.u32 %s97, 1
        %s337 = scalar_lea.sflag [#allocation4], %s336
        %s338 = sand.u32 %s97, 1
        %s339 = smul.addr %s338, 8
        %s340 = scalar_lea.vmem [#allocation7], %s339
        // Predicated region
        $region41: #{tpu_custom_call.1} parent=31 // pred_check
          %p341 = pneg %p107
        $region42: #{tpu_custom_call.1} parent=31 // pred_check_branch
          %343 = sbr.rel (%p341) target = $region44
        $region43: #{tpu_custom_call.1} parent=31 // pred_region
          %s345 = ssub.s32 128, 128
          %346 = vsyncadd %s337, %s345
          %s347 = smul.addr %s21, 128
          %s348 = scalar_lea.hbm %s3, %s347
          %s350 = sshll.u32 %s340, 4
          %s351 = int_to_ptr.vmem [resolvable:$true] %s350
          %353 = dma.vmem_to_hbm [thread:$0]  %s351, 128, %s348, %s337
        $region44: #{tpu_custom_call.1} parent=31 // pred_fallthru
          _
      $region32: #{tpu_custom_call.1} parent=5 // pred_fallthru
        _
      %p354 = scmp.le.s32.totalorder 2, %s16
      // Predicated region
      $region45: #{tpu_custom_call.1} parent=5 // pred_check
        %p355 = pneg %p354
      $region46: #{tpu_custom_call.1} parent=5 // pred_check_branch
        %357 = sbr.rel (%p355) target = $region48
      $region47: #{tpu_custom_call.1} parent=5 // pred_region
        %s358 = ssub.s32 %s16, 2
        // Predicated region
        $region49: #{tpu_custom_call.1} parent=47 // pred_check
          %p359 = pneg %p113
        $region50: #{tpu_custom_call.1} parent=47 // pred_check_branch
          %361 = sbr.rel (%p359) target = $region52
        $region51: #{tpu_custom_call.1} parent=47 // pred_region
          %s362 = sand.u32 %s98, 1
          %s363 = scalar_lea.sflag [#allocation4], %s362
          %s364 = sand.u32 %s98, 1
          %s365 = smul.addr %s364, 8
          %s366 = scalar_lea.vmem [#allocation7], %s365
          %367 = dma.done %s363, 128
        $region52: #{tpu_custom_call.1} parent=47 // pred_fallthru
          _
      $region48: #{tpu_custom_call.1} parent=5 // pred_fallthru
        _
    $region6: #{tpu_custom_call.1} parent=1 // loop_footer
      %s20 = sadd.s32 1, %s16
    $region7: #{tpu_custom_call.1} parent=1 // loop_footer_branch
      %15 = sbr.rel target = $region3
    $region8: #{tpu_custom_call.1} parent=1 // loop_exit
      _
    %368 = vsyncpa [#allocation3], 1
    %s369 = scalar_lea.sflag [#allocation3], 1
    %370 = vsyncpa %s369, 1
    %371 = vsyncpa [#allocation6], 1
    %372 = vsyncpa [#allocation4], 1
    %s373 = scalar_lea.sflag [#allocation4], 1
    %374 = vsyncpa %s373, 1

// kernel: tpu_custom_call.1
$region0: #{tpu_custom_call.1}
  #allocation0 [shape = 'u32[]', space=smem, size = 0x4, offset = 0x4, fixed_abs, tag = 'smem constant byte address 0x4 - core index']
  #allocation1 [shape = 'u32[144,128]{1,0:T(1,128)}', space=vmem, size = 0x12000, scoped, tag = 'internal scratch']
  %s0 = inlined_call_operand.hbm [shape: f32[16,128], index: 0, kind: input, shape index: {}]
  %s1 = inlined_call_operand.hbm [shape: bf16[128,128], index: 1, kind: input, shape index: {}]
  %s2 = inlined_call_operand.vmem [shape: f32[1,128], index: 2, kind: input, shape index: {}]
  %s3 = inlined_call_operand.hbm [shape: f32[16,128], index: 3, kind: output, shape index: {}]
  %s4 = sld [smem:[#allocation0]]
  $region53: #{tpu_custom_call.1} parent=0
    _
  %s6 = ssub.s32 1, %s4
  %s7 = scalar_select 0, %s6, %s4
  $region1: #{tpu_custom_call.1} parent=0
    #allocation2 [shape = 'u8[8192]{0}', space=vmem, size = 0x2000, scoped, tag = 'input window, operand 0']
    #allocation3 [shape = 's32[2]{0}', space=sflag, size = 0x8, scoped, tag = 'scoped memory for tpu_custom_call.1']
    #allocation4 [shape = 's32[2]{0}', space=sflag, size = 0x8, scoped, tag = 'scoped memory for tpu_custom_call.1']
    #allocation5 [shape = 'u8[32768]{0}', space=vmem, size = 0x8000, scoped, tag = 'input window, operand 1, single buffered']
    #allocation6 [shape = 's32[1]{0}', space=sflag, size = 0x4, scoped, tag = 'scoped memory for tpu_custom_call.1']
    #allocation7 [shape = 'u8[8192]{0}', space=vmem, size = 0x2000, scoped, tag = 'output window, operand 0']
    %8 = vsyncpa [#allocation3], 0
    %s9 = scalar_lea.sflag [#allocation3], 1
    %10 = vsyncpa %s9, 0
    %11 = vsyncpa [#allocation6], 0
    %12 = vsyncpa [#allocation4], 0
    %s13 = scalar_lea.sflag [#allocation4], 1
    %14 = vsyncpa %s13, 0
    loop: start=0, step=1, limit=4
    $region2: #{tpu_custom_call.1} parent=1 // loop_pre_header
      _
    $region3: #{tpu_custom_call.1} parent=1 // loop_header
      %s16 = sphi 0, %s20
      %p17 = scmp.ge.s32.totalorder %s16, 4
      %s26 = sphi 0, %s28
      %s29 = sphi 0, %s26
      %s30 = sphi 0, %s29
      %s46 = sphi 0, %s30
      %s50 = sphi 0, %s50
      %s52 = sphi 0, %s50
      %s53 = sphi 0, %s52
      %s67 = sphi 0, %s53
      %s71 = sphi 0, %s71
      %s73 = sphi 0, %s71
      %s74 = sphi 0, %s73
      %s88 = sphi 0, %s74
      %s94 = sphi 0, %s96
      %s97 = sphi 0, %s94
      %s98 = sphi 0, %s97
      %s114 = sphi 0, %s98
    $region4: #{tpu_custom_call.1} parent=1 // loop_header_branch
      %19 = sbr.rel (%p17) target = $region8
    $region5: #{tpu_custom_call.1} parent=1 // loop_body
      %s21 = ssub.s32 %s16, 1
      %s22 = ssub.s32 %s16, 2
      %s23 = sadd.s32 %s16, 1
      %s24 = ssub.s32 %s16, %s23
      %p25 = scmp.eq.s32.totalorder %s24, 0
      %s27 = sadd.s32 %s26, 1
      %s28 = scalar_select %p25, %s26, %s27
      %p31 = pneg %p25
      %p32 = scmp.eq.s32.totalorder %s16, 1
      %p33 = por %p31, %p32
      %p34 = scmp.ne.s32.totalorder %s26, %s29
      %p35 = scmp.eq.s32.totalorder %s16, 0
      %p36 = por %p34, %p35
      %p37 = scmp.ne.s32.totalorder %s26, %s29
      %p38 = scmp.eq.s32.totalorder %s21, 1
      %p39 = por %p37, %p38
      %p40 = scmp.ne.s32.totalorder %s29, %s30
      %p41 = scmp.eq.s32.totalorder %s21, 0
      %p42 = por %p40, %p41
      %p43 = scmp.ne.s32.totalorder %s29, %s30
      %p44 = scmp.eq.s32.totalorder %s22, 1
      %p45 = por %p43, %p44
      %p47 = scmp.ne.s32.totalorder %s30, %s46
      %p48 = scmp.eq.s32.totalorder %s22, 0
      %p49 = por %p47, %p48
      %s51 = sadd.s32 %s50, 1
      %p54 = scmp.eq.s32.totalorder %s16, 1
      %p55 = scmp.ne.s32.totalorder %s50, %s52
      %p56 = scmp.eq.s32.totalorder %s16, 0
      %p57 = por %p55, %p56
      %p58 = scmp.ne.s32.totalorder %s50, %s52
      %p59 = scmp.eq.s32.totalorder %s21, 1
      %p60 = por %p58, %p59
      %p61 = scmp.ne.s32.totalorder %s52, %s53
      %p62 = scmp.eq.s32.totalorder %s21, 0
      %p63 = por %p61, %p62
      %p64 = scmp.ne.s32.totalorder %s52, %s53
      %p65 = scmp.eq.s32.totalorder %s22, 1
      %p66 = por %p64, %p65
      %p68 = scmp.ne.s32.totalorder %s53, %s67
      %p69 = scmp.eq.s32.totalorder %s22, 0
      %p70 = por %p68, %p69
      %s72 = sadd.s32 %s71, 1
      %p75 = scmp.eq.s32.totalorder %s16, 1
      %p76 = scmp.ne.s32.totalorder %s71, %s73
      %p77 = scmp.eq.s32.totalorder %s16, 0
      %p78 = por %p76, %p77
      %p79 = scmp.ne.s32.totalorder %s71, %s73
      %p80 = scmp.eq.s32.totalorder %s21, 1
      %p81 = por %p79, %p80
      %p82 = scmp.ne.s32.totalorder %s73, %s74
      %p83 = scmp.eq.s32.totalorder %s21, 0
      %p84 = por %p82, %p83
      %p85 = scmp.ne.s32.totalorder %s73, %s74
      %p86 = scmp.eq.s32.totalorder %s22, 1
      %p87 = por %p85, %p86
      %p89 = scmp.ne.s32.totalorder %s74, %s88
      %p90 = scmp.eq.s32.totalorder %s22, 0
      %p91 = por %p89, %p90
      %s92 = ssub.s32 %s16, %s23
      %p93 = scmp.eq.s32.totalorder %s92, 0
      %s95 = sadd.s32 %s94, 1
      %s96 = scalar_select %p93, %s94, %s95
      %p99 = pneg %p93
      %p100 = scmp.eq.s32.totalorder %s16, 1
      %p101 = por %p99, %p100
      %p102 = scmp.ne.s32.totalorder %s94, %s97
      %p103 = scmp.eq.s32.totalorder %s16, 0
      %p104 = por %p102, %p103
      %p105 = scmp.ne.s32.totalorder %s94, %s97
      %p106 = scmp.eq.s32.totalorder %s21, 1
      %p107 = por %p105, %p106
      %p108 = scmp.ne.s32.totalorder %s97, %s98
      %p109 = scmp.eq.s32.totalorder %s21, 0
      %p110 = por %p108, %p109
      %p111 = scmp.ne.s32.totalorder %s97, %s98
      %p112 = scmp.eq.s32.totalorder %s22, 1
      %p113 = por %p111, %p112
      %p115 = scmp.ne.s32.totalorder %s98, %s114
      %p116 = scmp.eq.s32.totalorder %s22, 0
      %p117 = por %p115, %p116
      %p118 = scmp.le.s32.totalorder 1, %s16
      %p119 = scmp.lt.s32.totalorder %s16, 3
      %p120 = pnand %p118, %p119
      %p121 = pneg %p120
      // Predicated region
      $region9: #{tpu_custom_call.1} parent=5 // pred_check
        _
      $region10: #{tpu_custom_call.1} parent=5 // pred_check_branch
        %123 = sbr.rel (%p120) target = $region12
      $region11: #{tpu_custom_call.1} parent=5 // pred_region
        %s124 = ssub.s32 %s16, 1
        // Predicated region
        $region13: #{tpu_custom_call.1} parent=11 // pred_check
          %p125 = pneg %p63
        $region14: #{tpu_custom_call.1} parent=11 // pred_check_branch
          %127 = sbr.rel (%p125) target = $region16
        $region15: #{tpu_custom_call.1} parent=11 // pred_region
          %s129 = ssub.s32 1024, 1024
          %130 = vsyncadd [#allocation6], %s129
          %s131 = sshll.u32 [#allocation5], 4
          %s132 = int_to_ptr.vmem [resolvable:$true] %s131
          %137 = dma.hbm_to_vmem [thread:$0]  %s1, 1024, %s132, [#allocation6], 64, 64, 4
        $region16: #{tpu_custom_call.1} parent=11 // pred_fallthru
          _
        // Predicated region
        $region17: #{tpu_custom_call.1} parent=11 // pred_check
          %p138 = pneg %p84
        $region18: #{tpu_custom_call.1} parent=11 // pred_check_branch
          %140 = sbr.rel (%p138) target = $region20
        $region19: #{tpu_custom_call.1} parent=11 // pred_region
          _
        $region20: #{tpu_custom_call.1} parent=11 // pred_fallthru
          _
      $region12: #{tpu_custom_call.1} parent=5 // pred_fallthru
        _
      %p141 = scmp.lt.s32.totalorder %s16, 2
      // Predicated region
      $region21: #{tpu_custom_call.1} parent=5 // pred_check
        %p142 = pneg %p141
      $region22: #{tpu_custom_call.1} parent=5 // pred_check_branch
        %144 = sbr.rel (%p142) target = $region24
      $region23: #{tpu_custom_call.1} parent=5 // pred_region
        // Predicated region
        $region25: #{tpu_custom_call.1} parent=23 // pred_check
          %p145 = pneg %p36
        $region26: #{tpu_custom_call.1} parent=23 // pred_check_branch
          %147 = sbr.rel (%p145) target = $region28
        $region27: #{tpu_custom_call.1} parent=23 // pred_region
          %s148 = sand.u32 %s26, 1
          %s149 = scalar_lea.sflag [#allocation3], %s148
          %s150 = sand.u32 %s26, 1
          %s151 = smul.addr %s150, 8
          %s152 = scalar_lea.vmem [#allocation2], %s151
          %s154 = ssub.s32 128, 128
          %155 = vsyncadd %s149, %s154
          %s156 = smul.addr %s16, 128
          %s157 = scalar_lea.hbm %s0, %s156
          %s159 = sshll.u32 %s152, 4
          %s160 = int_to_ptr.vmem [resolvable:$true] %s159
          %162 = dma.hbm_to_vmem [thread:$0]  %s157, 128, %s160, %s149
        $region28: #{tpu_custom_call.1} parent=23 // pred_fallthru
          _
      $region24: #{tpu_custom_call.1} parent=5 // pred_fallthru
        _
      %p163 = scmp.le.s32.totalorder 1, %s16
      %p164 = scmp.lt.s32.totalorder %s16, 3
      %p165 = pnand %p163, %p164
      %p166 = pneg %p165
      // Predicated region
      $region29: #{tpu_custom_call.1} parent=5 // pred_check
        _
      $region30: #{tpu_custom_call.1} parent=5 // pred_check_branch
        %168 = sbr.rel (%p165) target = $region32
      $region31: #{tpu_custom_call.1} parent=5 // pred_region
        %s169 = ssub.s32 %s16, 1
        %s170 = sand.u32 %s29, 1
        %s171 = scalar_lea.sflag [#allocation3], %s170
        %s172 = sand.u32 %s29, 1
        %s173 = smul.addr %s172, 8
        %s174 = scalar_lea.vmem [#allocation2], %s173
        // Predicated region
        $region33: #{tpu_custom_call.1} parent=31 // pred_check
          %p175 = pneg %p42
        $region34: #{tpu_custom_call.1} parent=31 // pred_check_branch
          %177 = sbr.rel (%p175) target = $region36
        $region35: #{tpu_custom_call.1} parent=31 // pred_region
          %178 = dma.done %s171, 128
        $region36: #{tpu_custom_call.1} parent=31 // pred_fallthru
          _
        // Predicated region
        $region37: #{tpu_custom_call.1} parent=31 // pred_check
          %p179 = pneg %p63
        $region38: #{tpu_custom_call.1} parent=31 // pred_check_branch
          %181 = sbr.rel (%p179) target = $region40
        $region39: #{tpu_custom_call.1} parent=31 // pred_region
          %182 = dma.done [#allocation6], 1024
        $region40: #{tpu_custom_call.1} parent=31 // pred_fallthru
          _
        %s183 = sand.u32 %s29, 1
        %s184 = scalar_lea.sflag [#allocation3], %s183
        %s185 = sand.u32 %s29, 1
        %s186 = smul.addr %s185, 8
        %s187 = scalar_lea.vmem [#allocation2], %s186
        %p188 = pneg %p42
        %p189 = pneg %p39
        %p190 = pneg %p63
        %p191 = pneg %p60
        %p192 = pneg %p84
        %p193 = pneg %p81
        %p194 = pneg %p110
        %p195 = pneg %p107
        %s196 = sand.u32 %s97, 1
        %s197 = scalar_lea.sflag [#allocation4], %s196
        %s198 = sand.u32 %s97, 1
        %s199 = smul.addr %s198, 8
        %s200 = scalar_lea.vmem [#allocation7], %s199
        %v202 = vld [vmem:[%s174] sm:$0xff]
        %203 = vadd.xlane.f32.xlu0 %v202
        %v204 = vpop.xlane.xlu0 %203
        %v205 = vmul.f32 %v204, 0.0078125
        %v206 = vsub.f32 %v202, %v205
        %v207 = vmul.f32 %v206, %v206
        %208 = vadd.xlane.f32.xlu0 %v207
        %v209 = vpop.xlane.xlu0 %208
        %v210 = vmul.f32 %v209, 0.007874016
        %v211 = vrsqrt.pop %v210
        %v212 = vmul.f32 %v210, %v211
        %vm213 = vcmp.eq.f32.partialorder %v210, inf
        %v214 = vsel %vm213, %v210, %v212
        %vm215 = vcmp.eq.f32.partialorder %v210, 0.0
        %v216 = vand.u32 %v210, 2147483648
        %v217 = vsel %vm215, %v216, %v214
        %v218 = vadd.f32 %v217, 1e-06
        %v219 = vrcp.pop %v218
        %v220 = vmul.f32 %v206, %v219
        %v221 = vpack.c.bf16 %v220, %v220
        %v222 = vld [vmem:[#allocation5] sm:$0xf]
        %v223 = vld [vmem:[#allocation5 + $0x4] sm:$0xf]
        %v224 = vld [vmem:[#allocation5 + $0x8] sm:$0xf]
        %v225 = vld [vmem:[#allocation5 + $0xc] sm:$0xf]
        %v226 = vld [vmem:[#allocation5 + $0x10] sm:$0xf]
        %v227 = vld [vmem:[#allocation5 + $0x14] sm:$0xf]
        %v228 = vld [vmem:[#allocation5 + $0x18] sm:$0xf]
        %v229 = vld [vmem:[#allocation5 + $0x1c] sm:$0xf]
        %v230 = vld [vmem:[#allocation5 + $0x20] sm:$0xf]
        %v231 = vld [vmem:[#allocation5 + $0x24] sm:$0xf]
        %v232 = vld [vmem:[#allocation5 + $0x28] sm:$0xf]
        %v233 = vld [vmem:[#allocation5 + $0x2c] sm:$0xf]
        %v234 = vld [vmem:[#allocation5 + $0x30] sm:$0xf]
        %v235 = vld [vmem:[#allocation5 + $0x34] sm:$0xf]
        %v236 = vld [vmem:[#allocation5 + $0x38] sm:$0xf]
        %v237 = vld [vmem:[#allocation5 + $0x3c] sm:$0xf]
        %v254 = vunpack.c.l.b16 %v222
        %v255 = vunpack.c.l.b16 %v223
        %v256 = vunpack.c.l.b16 %v224
        %v257 = vunpack.c.l.b16 %v225
        %v258 = vunpack.c.l.b16 %v226
        %v259 = vunpack.c.l.b16 %v227
        %v260 = vunpack.c.l.b16 %v228
        %v261 = vunpack.c.l.b16 %v229
        %v262 = vunpack.c.l.b16 %v230
        %v263 = vunpack.c.l.b16 %v231
        %v264 = vunpack.c.l.b16 %v232
        %v265 = vunpack.c.l.b16 %v233
        %v266 = vunpack.c.l.b16 %v234
        %v267 = vunpack.c.l.b16 %v235
        %v268 = vunpack.c.l.b16 %v236
        %v269 = vunpack.c.l.b16 %v237
        %v270 = vpack.c.b16 %v255, %v254
        %v271 = vpack.c.b16 %v257, %v256
        %v272 = vpack.c.b16 %v259, %v258
        %v273 = vpack.c.b16 %v261, %v260
        %v274 = vpack.c.b16 %v263, %v262
        %v275 = vpack.c.b16 %v265, %v264
        %v276 = vpack.c.b16 %v267, %v266
        %v277 = vpack.c.b16 %v269, %v268
        %286 = vmatprep.subr.bf16.mxu0 0
        %287 = vmatpush1.bf16.msra.mxu0 %v277
        %288 = vmatprep.subr.bf16.mxu0 0
        %289 = vmatpush1.bf16.msra.mxu0 %v276
        %290 = vmatprep.subr.bf16.mxu0 0
        %291 = vmatpush1.bf16.msra.mxu0 %v275
        %292 = vmatprep.subr.bf16.mxu0 0
        %293 = vmatpush1.bf16.msra.mxu0 %v274
        %294 = vmatprep.subr.bf16.mxu0 0
        %295 = vmatpush1.bf16.msra.mxu0 %v273
        %296 = vmatprep.subr.bf16.mxu0 0
        %297 = vmatpush1.bf16.msra.mxu0 %v272
        %298 = vmatprep.subr.bf16.mxu0 0
        %299 = vmatpush1.bf16.msra.mxu0 %v271
        %300 = vmatprep.subr.bf16.mxu0 0
        %301 = vmatpush1.bf16.msra.mxu0 %v270
        %302 = vmatprep.subr.bf16.mxu0 0
        %303 = vmatpush2.bf16.msra.mxu0 0
        %304 = vmatprep.subr.bf16.mxu0 0
        %305 = vmatpush2.bf16.msra.mxu0 0
        %306 = vmatprep.subr.bf16.mxu0 0
        %307 = vmatpush2.bf16.msra.mxu0 0
        %308 = vmatprep.subr.bf16.mxu0 0
        %309 = vmatpush2.bf16.msra.mxu0 0
        %310 = vmatprep.subr.bf16.mxu0 0
        %311 = vmatpush2.bf16.msra.mxu0 0
        %312 = vmatprep.subr.bf16.mxu0 0
        %313 = vmatpush2.bf16.msra.mxu0 0
        %314 = vmatprep.subr.bf16.mxu0 0
        %315 = vmatpush2.bf16.msra.mxu0 0
        %316 = vmatprep.subr.bf16.mxu0 0
        %317 = vmatpush2.bf16.msra.mxu0 0
        %318 = vmatprep.mubr.bf16.mxu0 0
        %319 = vmatmul.mubr.bf16.gmra.mxu0 %v221
        %v320 = vpop.f32.mrf.mxu0
        %v321 = vadd.f32 0.0, %v320
        %v322 = vpop.f32.mrf.mxu0
        %v323 = vpop.f32.mrf.mxu0
        %v324 = vpop.f32.mrf.mxu0
        %325 = vdwg.mxu0
        %v326 = vadd.f32 %v202, %v321
        %v327 = vld [vmem:[%s2] sm:$0x1]
        %v329 = vlaneseq
        %v330 = vshrl.u32 %v329, 7
        %v331 = vsub.s32 0, %v330
        %v332 = vrot.slane %v327, %v331
        %v334 = vadd.f32 %v326, %v332
        %335 = vst [vmem:[%s200] sm:$0xff] %v334
        %s336 = sand.u32 %s97, 1
        %s337 = scalar_lea.sflag [#allocation4], %s336
        %s338 = sand.u32 %s97, 1
        %s339 = smul.addr %s338, 8
        %s340 = scalar_lea.vmem [#allocation7], %s339
        // Predicated region
        $region41: #{tpu_custom_call.1} parent=31 // pred_check
          %p341 = pneg %p107
        $region42: #{tpu_custom_call.1} parent=31 // pred_check_branch
          %343 = sbr.rel (%p341) target = $region44
        $region43: #{tpu_custom_call.1} parent=31 // pred_region
          %s345 = ssub.s32 128, 128
          %346 = vsyncadd %s337, %s345
          %s347 = smul.addr %s21, 128
          %s348 = scalar_lea.hbm %s3, %s347
          %s350 = sshll.u32 %s340, 4
          %s351 = int_to_ptr.vmem [resolvable:$true] %s350
          %353 = dma.vmem_to_hbm [thread:$0]  %s351, 128, %s348, %s337
        $region44: #{tpu_custom_call.1} parent=31 // pred_fallthru
          _
      $region32: #{tpu_custom_call.1} parent=5 // pred_fallthru
        _
      %p354 = scmp.le.s32.totalorder 2, %s16
      // Predicated region
      $region45: #{tpu_custom_call.1} parent=5 // pred_check
        %p355 = pneg %p354
      $region46: #{tpu_custom_call.1} parent=5 // pred_check_branch
        %357 = sbr.rel (%p355) target = $region48
      $region47: #{tpu_custom_call.1} parent=5 // pred_region
        %s358 = ssub.s32 %s16, 2
        // Predicated region
        $region49: #{tpu_custom_call.1} parent=47 // pred_check
          %p359 = pneg %p113
        $region50: #{tpu_custom_call.1} parent=47 // pred_check_branch
          %361 = sbr.rel (%p359) target = $region52
        $region51: #{tpu_custom_call.1} parent=47 // pred_region
          %s362 = sand.u32 %s98, 1
          %s363 = scalar_lea.sflag [#allocation4], %s362
          %s364 = sand.u32 %s98, 1
          %s365 = smul.addr %s364, 8
          %s366 = scalar_lea.vmem [#allocation7], %s365
          %367 = dma.done %s363, 128
        $region52: #{tpu_custom_call.1} parent=47 // pred_fallthru
          _
      $region48: #{tpu_custom_call.1} parent=5 // pred_fallthru
        _
    $region6: #{tpu_custom_call.1} parent=1 // loop_footer
      %s20 = sadd.s32 1, %s16
    $region7: #{tpu_custom_call.1} parent=1 // loop_footer_branch
      %15 = sbr.rel target = $region3
    $region8: #{tpu_custom_call.1} parent=1 // loop_exit
      _
    %368 = vsyncpa [#allocation3], 1
    %s369 = scalar_lea.sflag [#allocation3], 1
    %370 = vsyncpa %s369, 1
    %371 = vsyncpa [#allocation6], 1
    %372 = vsyncpa [#allocation4], 1
    %s373 = scalar_lea.sflag [#allocation4], 1
    %374 = vsyncpa %s373, 1

</llo_original>
